<compile_context>
chip_gen: v7x
topology: tpu7x:2x2x1
jax: 0.10.0
libtpu: 0.0.40
codegen_flags: <defaults>
</compile_context>

<pallas_src>
import functools

import jax
import jax.numpy as jnp
from jax.experimental import pallas as pl
from jax.experimental.pallas import tpu as pltpu


def _cbn_kernel(x_ref, o_ref, *, hw):
    """x_ref / o_ref: (rb, 2*hw) blocks whose lanes interleave (re, im, re, im, ...)."""
    t = x_ref[...].astype(jnp.float32)
    n2 = t.shape[-1]                                     # == 2 * hw (static)

    # ---- tiny (1, n2) helper rows: negligible next to the (rb, n2) block ops -------
    lane = jax.lax.broadcasted_iota(jnp.int32, (1, n2), 1)
    is_re_f = ((lane & 1) == 0).astype(jnp.float32)      # 1.0 on real (even) lanes
    is_im_f = 1.0 - is_re_f
    # Single-row probe resolving the pltpu.roll rotation direction (replaces the old
    # block-wide probe).  Block-wide cost below is 2 rolls + 1 select + 1 add either way.
    lane_f = lane.astype(jnp.float32)
    probe = pltpu.roll(lane_f, 1, axis=1)
    rolls_down = (jnp.sum(jnp.where(probe < lane_f, 1.0, 0.0), axis=-1, keepdims=True)
                  > jnp.float32(n2 // 2))                # True -> roll(x, 1)[i] == x[i-1]
    # Lanes whose pair-partner is delivered by roll-by-1 (the rest use roll-by-(n2-1)).
    take_r1 = jnp.where(rolls_down, is_im_f, is_re_f) > 0.5   # (1, n2) bool

    # ---- |z|^2 per lane: partner's square via 2 XLU rolls + 1 parity select --------
    t2 = t * t
    r1 = pltpu.roll(t2, 1, axis=1)
    rm1 = pltpu.roll(t2, n2 - 1, axis=1)
    sq = t2 + jnp.where(take_r1, r1, rm1)                # pairwise-constant |z|^2

    # good == False  <=>  |z| == 0 (torch: atan2(0,0)=0 -> (cos,sin)=(1,0)) or NaN input.
    good = sq > jnp.float32(0.0)
    inv_mag = jax.lax.rsqrt(jnp.where(good, sq, jnp.float32(1.0)))   # EUP, no divides
    mag = sq * inv_mag            # sqrt(|z|^2); 0 stays 0, NaN propagates (row zeroed)

    # Per-(b, c) stats over the hw complex elements (each magnitude counted twice along
    # lanes, hence the 2*hw / 2*(hw-1) denominators).
    mean = jnp.sum(mag, axis=-1, keepdims=True) / jnp.float32(2 * hw)
    diff = mag - mean
    # Unbiased variance (torch.std default, ddof=1). hw == 1 -> 0/0 = NaN -> row zeroed,
    # exactly like torch.
    var = jnp.sum(diff * diff, axis=-1, keepdims=True) / jnp.float32(2 * (hw - 1))
    nmag = diff * jax.lax.rsqrt(var) + jnp.float32(1.0)
    nmag = jnp.where(jnp.isnan(nmag), jnp.float32(0.0), nmag)        # torch: x[x.ne(x)] = 0

    # cos(phase) on real lanes / sin(phase) on imag lanes is just t * (1/|z|);
    # degenerate lanes get (cos, sin) = (1, 0) == is_re_f.
    cs = jnp.where(good, t * inv_mag, is_re_f)
    o_ref[...] = (nmag * cs).astype(o_ref.dtype)


def _vmem_capacity_bytes():
    """Physical VMEM per TensorCore; conservative 64 MiB fallback if unqueryable."""
    try:
        if hasattr(pltpu, "get_tpu_info"):
            cap = getattr(pltpu.get_tpu_info(), "vmem_capacity_bytes", None)
            if cap:
                return int(cap)
    except Exception:
        pass
    return 64 << 20


def _choose_row_block(bc, hw, tile_budget_bytes, itemsize):
    """Largest sublane-aligned row tile fitting the VMEM budget, targeting >= 8 grid
    steps for large problems (pipelining + v7x 2-TC split) and >= 512 KiB DMA/step."""
    sublane = max(8, 32 // max(1, itemsize))             # 8 rows f32, 16 rows bf16
    io_row = 2 * hw * itemsize
    # Live block-sized buffers per step: double-buffered in + out at I/O width (4)
    # plus ~5 f32 kernel temporaries (t2, two rolls, selected sq, cs/products).
    live_row = 4 * io_row + 5 * (2 * hw * 4)
    rows_by_vmem = max(1, tile_budget_bytes // live_row)
    rows_min_dma = -((-(512 << 10)) // io_row)           # keep per-step DMA >= 512 KiB
    rows_by_grid = max(sublane, bc // 8, rows_min_dma)
    rb = min(bc, rows_by_vmem, rows_by_grid)
    rb = max(sublane, (rb // sublane) * sublane)
    return bc if rb >= bc else rb


def complex_batch_normalize(x, *, tile_budget_bytes=None):
    """x: (B, C, H, W, 2) float array -> same shape/dtype (magnitude-normalized complex)."""
    B, C, H, W, two = x.shape
    assert two == 2, "last dim must be (real, imag)"
    BC, HW = B * C, H * W

    cap = _vmem_capacity_bytes()
    if cap >= (96 << 20):            # v5e / v6e: 128 MiB physical VMEM per core
        vmem_limit = 96 << 20
        budget = 48 << 20
    else:                            # v7x: 64 MiB per TensorCore
        vmem_limit = 48 << 20
        budget = 16 << 20
    if tile_budget_bytes is not None:
        budget = tile_budget_bytes

    itemsize = jnp.dtype(x.dtype).itemsize
    rb = _choose_row_block(BC, HW, budget, itemsize)

    # If even the minimum sublane-aligned tile exceeds the budget (very large H*W),
    # raise the scoped VMEM limit toward physical capacity rather than overflowing it.
    min_tile_bytes = rb * (4 * (2 * HW * itemsize) + 5 * (2 * HW * 4))
    vmem_limit = min(cap - (8 << 20), max(vmem_limit, min_tile_bytes + (4 << 20)))
    # TODO(synk): for H*W so large that one sublane-height block no longer fits v7x's
    # 64 MiB VMEM (~256x256 images), add a second 'arbitrary' lane-split grid axis with
    # a streaming two-pass (stats accumulated in VMEM scratch, then a normalize pass).

    x2d = x.reshape(BC, 2 * HW)      # free reshape; lanes stay (re, im) interleaved
    grid = (pl.cdiv(BC, rb),)

    out2d = pl.pallas_call(
        functools.partial(_cbn_kernel, hw=HW),
        out_shape=jax.ShapeDtypeStruct((BC, 2 * HW), x.dtype),
        grid_spec=pltpu.PrefetchScalarGridSpec(
            num_scalar_prefetch=0,
            grid=grid,
            in_specs=[pl.BlockSpec((rb, 2 * HW), lambda i: (i, 0))],
            out_specs=pl.BlockSpec((rb, 2 * HW), lambda i: (i, 0)),
        ),
        compiler_params=pltpu.CompilerParams(
            dimension_semantics=("parallel",),   # shards rows across TCs on multi-core chips
            vmem_limit_bytes=int(vmem_limit),
        ),
    )(x2d)
    return out2d.reshape(B, C, H, W, 2)


def _reference(x):
    """Pure-JAX replica of the torch forward (5-D case), for validation."""
    re, im = x[..., 0], x[..., 1]
    mag = jnp.sqrt(re * re + im * im)
    phase = jnp.arctan2(im, re)
    B, C, H, W = mag.shape
    m = mag.reshape(B, C, H * W)
    mean = jnp.mean(m, axis=-1).reshape(B, C, 1, 1)
    std = jnp.std(m, axis=-1, ddof=1).reshape(B, C, 1, 1)
    nmag = (mag - mean) / std + 1.0
    y = jnp.stack([nmag, phase], axis=-1)
    y = jnp.where(jnp.isnan(y), 0.0, y)
    nmag, phase = y[..., 0], y[..., 1]
    return jnp.stack([nmag * jnp.cos(phase), nmag * jnp.sin(phase)], axis=-1)


if __name__ == "__main__":
    # ComplexBatchNormalize has no learnable parameters (empty __init__).
    key = jax.random.PRNGKey(0)
    B, C, H, W = 2, 4, 16, 16
    x = jax.random.normal(key, (B, C, H, W, 2), dtype=jnp.float32)

    fn = jax.jit(complex_batch_normalize)
    out = fn(x)
    out = jax.block_until_ready(out)

    ref = _reference(x)
    assert out.shape == x.shape and out.dtype == x.dtype
    assert jnp.allclose(out, ref, atol=1e-4, rtol=1e-4), "mismatch vs reference"

    print("KERNEL_OK")
</pallas_src>

<mosaic_0001>
module attributes {stable_mosaic.version = 11 : i64} {
  func.func @_cbn_kernel(%arg0: i32, %arg1: memref<8x512xf32, #tpu.memory_space<vmem>>, %arg2: memref<8x512xf32, #tpu.memory_space<vmem>>) attributes {dimension_semantics = [#tpu.dimension_semantics<parallel>], iteration_bounds = array<i64: 1>, scalar_prefetch = 0 : i64, scratch_operands = 0 : i64, tpu.core_type = #tpu.core_type<tc>, window_params = [{transform_indices = @transform_0, window_bounds = array<i64: 8, 512>}, {transform_indices = @transform_1, window_bounds = array<i64: 8, 512>}]} {
    %c0 = arith.constant 0 : index
    %c0_0 = arith.constant 0 : index
    %0 = vector.load %arg1[%c0, %c0_0] : memref<8x512xf32, #tpu.memory_space<vmem>>, vector<8x512xf32>
    %1 = tpu.iota {dimensions = array<i32: 1>} : vector<1x512xi32>
    %c1_i32 = arith.constant 1 : i32
    %2 = vector.broadcast %c1_i32 : i32 to vector<1x512xi32>
    %3 = arith.andi %1, %2 : vector<1x512xi32>
    %c0_i32 = arith.constant 0 : i32
    %4 = vector.broadcast %c0_i32 : i32 to vector<1x512xi32>
    %5 = arith.cmpi eq, %3, %4 : vector<1x512xi32>
    %6 = arith.extui %5 : vector<1x512xi1> to vector<1x512xi32>
    %7 = arith.sitofp %6 : vector<1x512xi32> to vector<1x512xf32>
    %cst = arith.constant 1.000000e+00 : f32
    %8 = vector.broadcast %cst : f32 to vector<1x512xf32>
    %9 = arith.subf %8, %7 : vector<1x512xf32>
    %10 = arith.sitofp %1 : vector<1x512xi32> to vector<1x512xf32>
    %c1_i32_1 = arith.constant 1 : i32
    %11 = tpu.dynamic_rotate %10 by %c1_i32_1 dim 1 : vector<1x512xf32>, i32 -> vector<1x512xf32>
    %12 = arith.cmpf olt, %11, %10 : vector<1x512xf32>
    %cst_2 = arith.constant 1.000000e+00 : f32
    %cst_3 = arith.constant 0.000000e+00 : f32
    %13 = vector.broadcast %cst_2 : f32 to vector<1x512xf32>
    %14 = vector.broadcast %cst_3 : f32 to vector<1x512xf32>
    %15 = arith.select %12, %13, %14 : vector<1x512xi1>, vector<1x512xf32>
    %cst_4 = arith.constant dense<0.000000e+00> : vector<1xf32>
    %16 = vector.multi_reduction <add>, %15, %cst_4 [1] : vector<1x512xf32> to vector<1xf32>
    %17 = vector.shape_cast %16 : vector<1xf32> to vector<1x1xf32>
    %cst_5 = arith.constant 2.560000e+02 : f32
    %18 = vector.broadcast %cst_5 : f32 to vector<1x1xf32>
    %19 = arith.cmpf ogt, %17, %18 : vector<1x1xf32>
    %20 = vector.shape_cast %19 : vector<1x1xi1> to vector<1x1xi1>
    %21 = vector.broadcast %20 : vector<1x1xi1> to vector<1x512xi1>
    %22 = arith.select %21, %9, %7 : vector<1x512xi1>, vector<1x512xf32>
    %cst_6 = arith.constant 5.000000e-01 : f32
    %23 = vector.broadcast %cst_6 : f32 to vector<1x512xf32>
    %24 = arith.cmpf ogt, %22, %23 : vector<1x512xf32>
    %25 = arith.mulf %0, %0 : vector<8x512xf32>
    %c1_i32_7 = arith.constant 1 : i32
    %26 = tpu.dynamic_rotate %25 by %c1_i32_7 dim 1 : vector<8x512xf32>, i32 -> vector<8x512xf32>
    %c511_i32 = arith.constant 511 : i32
    %27 = tpu.dynamic_rotate %25 by %c511_i32 dim 1 : vector<8x512xf32>, i32 -> vector<8x512xf32>
    %28 = vector.shape_cast %24 : vector<1x512xi1> to vector<1x512xi1>
    %29 = vector.broadcast %28 : vector<1x512xi1> to vector<8x512xi1>
    %30 = arith.select %29, %26, %27 : vector<8x512xi1>, vector<8x512xf32>
    %31 = arith.addf %25, %30 : vector<8x512xf32>
    %cst_8 = arith.constant 0.000000e+00 : f32
    %32 = vector.broadcast %cst_8 : f32 to vector<8x512xf32>
    %33 = arith.cmpf ogt, %31, %32 : vector<8x512xf32>
    %cst_9 = arith.constant 1.000000e+00 : f32
    %34 = vector.broadcast %cst_9 : f32 to vector<8x512xf32>
    %35 = arith.select %33, %31, %34 : vector<8x512xi1>, vector<8x512xf32>
    %36 = math.rsqrt %35 : vector<8x512xf32>
    %37 = arith.mulf %31, %36 : vector<8x512xf32>
    %cst_10 = arith.constant dense<0.000000e+00> : vector<8xf32>
    %38 = vector.multi_reduction <add>, %37, %cst_10 [1] : vector<8x512xf32> to vector<8xf32>
    %39 = vector.shape_cast %38 : vector<8xf32> to vector<8x1xf32>
    %cst_11 = arith.constant 5.120000e+02 : f32
    %40 = vector.broadcast %cst_11 : f32 to vector<8x1xf32>
    %41 = arith.divf %39, %40 : vector<8x1xf32>
    %42 = vector.broadcast %41 : vector<8x1xf32> to vector<8x512xf32>
    %43 = arith.subf %37, %42 : vector<8x512xf32>
    %44 = arith.mulf %43, %43 : vector<8x512xf32>
    %cst_12 = arith.constant dense<0.000000e+00> : vector<8xf32>
    %45 = vector.multi_reduction <add>, %44, %cst_12 [1] : vector<8x512xf32> to vector<8xf32>
    %46 = vector.shape_cast %45 : vector<8xf32> to vector<8x1xf32>
    %cst_13 = arith.constant 5.100000e+02 : f32
    %47 = vector.broadcast %cst_13 : f32 to vector<8x1xf32>
    %48 = arith.divf %46, %47 : vector<8x1xf32>
    %49 = math.rsqrt %48 : vector<8x1xf32>
    %50 = vector.broadcast %49 : vector<8x1xf32> to vector<8x512xf32>
    %51 = arith.mulf %43, %50 : vector<8x512xf32>
    %cst_14 = arith.constant 1.000000e+00 : f32
    %52 = vector.broadcast %cst_14 : f32 to vector<8x512xf32>
    %53 = arith.addf %51, %52 : vector<8x512xf32>
    %54 = arith.cmpf one, %53, %53 : vector<8x512xf32>
    %cst_15 = arith.constant 0.000000e+00 : f32
    %55 = vector.broadcast %cst_15 : f32 to vector<8x512xf32>
    %56 = arith.select %54, %55, %53 : vector<8x512xi1>, vector<8x512xf32>
    %57 = arith.mulf %0, %36 : vector<8x512xf32>
    %58 = vector.shape_cast %7 : vector<1x512xf32> to vector<1x512xf32>
    %59 = vector.broadcast %58 : vector<1x512xf32> to vector<8x512xf32>
    %60 = arith.select %33, %57, %59 : vector<8x512xi1>, vector<8x512xf32>
    %61 = arith.mulf %56, %60 : vector<8x512xf32>
    %c0_16 = arith.constant 0 : index
    %c0_17 = arith.constant 0 : index
    %62 = vector.load %arg2[%c0_16, %c0_17] : memref<8x512xf32, #tpu.memory_space<vmem>>, vector<8x512xf32>
    tpu.vector_store %arg2[%c0_16, %c0_17], %61 {strides = array<i32>} : memref<8x512xf32, #tpu.memory_space<vmem>>, vector<8x512xf32>,
    return
  }
  func.func @transform_0(%arg0: i32) -> (i32, i32) {
    %c0_i32 = arith.constant 0 : i32
    %c0_i32_0 = arith.constant 0 : i32
    return %arg0, %c0_i32 : i32, i32
  }
  func.func @transform_1(%arg0: i32) -> (i32, i32) {
    %c0_i32 = arith.constant 0 : i32
    %c0_i32_0 = arith.constant 0 : i32
    return %arg0, %c0_i32 : i32, i32
  }
}

</mosaic_0001>

<llo_original>
// kernel: complex_batch_normalize.1
$region0: #{complex_batch_normalize.1}
  #allocation0 [shape = 'u32[]', space=smem, size = 0x4, offset = 0x4, fixed_abs, tag = 'smem constant byte address 0x4 - core index']
  #allocation1 [shape = 'u32[144,128]{1,0:T(1,128)}', space=vmem, size = 0x12000, scoped, tag = 'internal scratch']
  %s0 = inlined_call_operand.vmem [shape: f32[8,512], index: 0, kind: input, shape index: {}]
  %s1 = inlined_call_operand.vmem [shape: f32[8,512], index: 1, kind: output, shape index: {}]
  %s2 = sld [smem:[#allocation0]]
  $region14: #{complex_batch_normalize.1} parent=0
    _
  %s4 = ssub.s32 1, %s2
  %s5 = scalar_select 0, %s4, %s2
  // Predicated region
  $region2: #{complex_batch_normalize.1} parent=0 // pred_check
    _
  $region3: #{complex_batch_normalize.1} parent=0 // pred_check_branch
    %7 = sbr.rel (0) target = $region5
  $region4: #{complex_batch_normalize.1} parent=0 // pred_region
    _
  $region5: #{complex_batch_normalize.1} parent=0 // pred_fallthru
    _
  %v8 = vld [vmem:[%s0] sm:$0xff]
  %v9 = vld [vmem:[%s0 + $0x8] sm:$0xff]
  %v10 = vld [vmem:[%s0 + $0x10] sm:$0xff]
  %v11 = vld [vmem:[%s0 + $0x18] sm:$0xff]
  %v12 = vlaneseq
  %v13 = vand.u32 %v12, 127
  %v14 = vadd.s32 %v13, 128
  %v15 = vadd.s32 %v13, 256
  %v16 = vadd.s32 %v13, 384
  %v17 = vand.u32 %v13, 1
  %v18 = vand.u32 %v14, 1
  %v19 = vand.u32 %v15, 1
  %v20 = vand.u32 %v16, 1
  %vm21 = vcmp.eq.s32.totalorder %v17, 0
  %vm22 = vcmp.eq.s32.totalorder %v18, 0
  %vm23 = vcmp.eq.s32.totalorder %v19, 0
  %vm24 = vcmp.eq.s32.totalorder %v20, 0
  %v25 = vsel %vm21, 1, 0
  %v26 = vsel %vm22, 1, 0
  %v27 = vsel %vm23, 1, 0
  %v28 = vsel %vm24, 1, 0
  %v29 = vcvt.s32.f32 %v25
  %v30 = vcvt.s32.f32 %v26
  %v31 = vcvt.s32.f32 %v27
  %v32 = vcvt.s32.f32 %v28
  %v33 = vsub.f32 1.0, %v29
  %v34 = vsub.f32 1.0, %v30
  %v35 = vsub.f32 1.0, %v31
  %v36 = vsub.f32 1.0, %v32
  %v37 = vcvt.s32.f32 %v13
  %v38 = vcvt.s32.f32 %v14
  %v39 = vcvt.s32.f32 %v15
  %v40 = vcvt.s32.f32 %v16
  %41 = vrot.lane.b32.xlu0 %v37, 1
  %v42 = vpop.permute.xlu0 %41
  %43 = vrot.lane.b32.xlu0 %v38, 1
  %v44 = vpop.permute.xlu0 %43
  %45 = vrot.lane.b32.xlu0 %v39, 1
  %v46 = vpop.permute.xlu0 %45
  %47 = vrot.lane.b32.xlu0 %v40, 1
  %v48 = vpop.permute.xlu0 %47
  %vm49 = vcmp.lt.s32.totalorder %v13, 1
  %v50 = vsel %vm49, %v46, %v48
  %v51 = vsel %vm49, %v44, %v46
  %v52 = vsel %vm49, %v42, %v44
  %v53 = vsel %vm49, %v48, %v42
  %vm54 = vcmp.lt.f32.partialorder %v53, %v37
  %vm55 = vcmp.lt.f32.partialorder %v52, %v38
  %vm56 = vcmp.lt.f32.partialorder %v51, %v39
  %vm57 = vcmp.lt.f32.partialorder %v50, %v40
  %v58 = vsel %vm54, 1.0, 0.0
  %v59 = vsel %vm55, 1.0, 0.0
  %v60 = vsel %vm56, 1.0, 0.0
  %v61 = vsel %vm57, 1.0, 0.0
  %vm62 = vcmask 1040384
  %v63 = vsel %vm62, %v58, 0.0
  %v64 = vsel %vm62, %v59, 0.0
  %v65 = vadd.f32 %v63, %v64
  %v66 = vsel %vm62, %v60, 0.0
  %v67 = vadd.f32 %v65, %v66
  %v68 = vsel %vm62, %v61, 0.0
  %v69 = vadd.f32 %v67, %v68
  %70 = vadd.xlane.f32.xlu0 %v69
  %v71 = vpop.xlane.xlu0 %70
  %vm72 = vcmp.gt.f32.partialorder %v71, 256.0
  %v73 = vsel %vm72, 1, 0
  %vm74 = vcmp.eq.s32.totalorder %v73, 1
  %v75 = vsel %vm74, %v33, %v29
  %v76 = vsel %vm74, %v34, %v30
  %v77 = vsel %vm74, %v35, %v31
  %v78 = vsel %vm74, %v36, %v32
  %vm79 = vcmp.gt.f32.partialorder %v75, 0.5
  %vm80 = vcmp.gt.f32.partialorder %v76, 0.5
  %vm81 = vcmp.gt.f32.partialorder %v77, 0.5
  %vm82 = vcmp.gt.f32.partialorder %v78, 0.5
  %v83 = vmul.f32 %v8, %v8
  %v84 = vmul.f32 %v9, %v9
  %v85 = vmul.f32 %v10, %v10
  %v86 = vmul.f32 %v11, %v11
  %87 = vrot.lane.b32.xlu0 %v83, 1
  %v88 = vpop.permute.xlu0 %87
  %89 = vrot.lane.b32.xlu0 %v84, 1
  %v90 = vpop.permute.xlu0 %89
  %91 = vrot.lane.b32.xlu0 %v85, 1
  %v92 = vpop.permute.xlu0 %91
  %93 = vrot.lane.b32.xlu0 %v86, 1
  %v94 = vpop.permute.xlu0 %93
  %v95 = vsel %vm49, %v92, %v94
  %v96 = vsel %vm49, %v90, %v92
  %v97 = vsel %vm49, %v88, %v90
  %v98 = vsel %vm49, %v94, %v88
  %99 = vrot.lane.b32.xlu0 %v83, 127
  %v100 = vpop.permute.xlu0 %99
  %101 = vrot.lane.b32.xlu0 %v84, 127
  %v102 = vpop.permute.xlu0 %101
  %103 = vrot.lane.b32.xlu0 %v85, 127
  %v104 = vpop.permute.xlu0 %103
  %105 = vrot.lane.b32.xlu0 %v86, 127
  %v106 = vpop.permute.xlu0 %105
  %vm107 = vcmp.lt.s32.totalorder %v13, 127
  %v108 = vsel %vm107, %v104, %v106
  %v109 = vsel %vm107, %v102, %v104
  %v110 = vsel %vm107, %v100, %v102
  %v111 = vsel %vm107, %v106, %v100
  %v112 = vsel %vm79, 1, 0
  %v113 = vsel %vm80, 1, 0
  %v114 = vsel %vm81, 1, 0
  %v115 = vsel %vm82, 1, 0
  %v116 = vlaneseq
  %v117 = vshrl.u32 %v116, 7
  %v118 = vsub.s32 0, %v117
  %v119 = vrot.slane %v112, %v118
  %v120 = vlaneseq
  %v121 = vshrl.u32 %v120, 7
  %v122 = vsub.s32 0, %v121
  %v123 = vrot.slane %v113, %v122
  %v124 = vlaneseq
  %v125 = vshrl.u32 %v124, 7
  %v126 = vsub.s32 0, %v125
  %v127 = vrot.slane %v114, %v126
  %v128 = vlaneseq
  %v129 = vshrl.u32 %v128, 7
  %v130 = vsub.s32 0, %v129
  %v131 = vrot.slane %v115, %v130
  %vm132 = vcmp.eq.s32.totalorder %v119, 1
  %vm133 = vcmp.eq.s32.totalorder %v123, 1
  %vm134 = vcmp.eq.s32.totalorder %v127, 1
  %vm135 = vcmp.eq.s32.totalorder %v131, 1
  %v136 = vsel %vm132, %v98, %v110
  %v137 = vsel %vm133, %v97, %v109
  %v138 = vsel %vm134, %v96, %v108
  %v139 = vsel %vm135, %v95, %v111
  %v140 = vadd.f32 %v83, %v136
  %v141 = vadd.f32 %v84, %v137
  %v142 = vadd.f32 %v85, %v138
  %v143 = vadd.f32 %v86, %v139
  %vm144 = vcmp.gt.f32.partialorder %v140, 0.0
  %vm145 = vcmp.gt.f32.partialorder %v141, 0.0
  %vm146 = vcmp.gt.f32.partialorder %v142, 0.0
  %vm147 = vcmp.gt.f32.partialorder %v143, 0.0
  %v148 = vsel %vm144, %v140, 1.0
  %v149 = vsel %vm145, %v141, 1.0
  %v150 = vsel %vm146, %v142, 1.0
  %v151 = vsel %vm147, %v143, 1.0
  %v152 = vrsqrt.pop %v148
  %v153 = vrsqrt.pop %v149
  %v154 = vrsqrt.pop %v150
  %v155 = vrsqrt.pop %v151
  %v156 = vmul.f32 %v140, %v152
  %v157 = vmul.f32 %v141, %v153
  %v158 = vmul.f32 %v142, %v154
  %v159 = vmul.f32 %v143, %v155
  %v160 = vadd.f32 %v156, %v157
  %v161 = vadd.f32 %v160, %v158
  %v162 = vadd.f32 %v161, %v159
  %163 = vadd.xlane.f32.xlu0 %v162
  %v164 = vpop.xlane.xlu0 %163
  %v165 = vrcp.pop 512.0
  %v166 = vmul.f32 %v164, %v165
  %v167 = vsub.f32 %v156, %v166
  %v168 = vsub.f32 %v157, %v166
  %v169 = vsub.f32 %v158, %v166
  %v170 = vsub.f32 %v159, %v166
  %v171 = vmul.f32 %v167, %v167
  %v172 = vmul.f32 %v168, %v168
  %v173 = vmul.f32 %v169, %v169
  %v174 = vmul.f32 %v170, %v170
  %v175 = vadd.f32 %v171, %v172
  %v176 = vadd.f32 %v175, %v173
  %v177 = vadd.f32 %v176, %v174
  %178 = vadd.xlane.f32.xlu0 %v177
  %v179 = vpop.xlane.xlu0 %178
  %v180 = vrcp.pop 510.0
  %v181 = vmul.f32 %v179, %v180
  %v182 = vrsqrt.pop %v181
  %v183 = vmul.f32 %v167, %v182
  %v184 = vmul.f32 %v168, %v182
  %v185 = vmul.f32 %v169, %v182
  %v186 = vmul.f32 %v170, %v182
  %v187 = vadd.f32 %v183, 1.0
  %v188 = vadd.f32 %v184, 1.0
  %v189 = vadd.f32 %v185, 1.0
  %v190 = vadd.f32 %v186, 1.0
  %vm191 = vcmp.ne.f32.partialorder %v187, %v187
  %vm192 = vcmp.ne.f32.partialorder %v188, %v188
  %vm193 = vcmp.ne.f32.partialorder %v189, %v189
  %vm194 = vcmp.ne.f32.partialorder %v190, %v190
  %v195 = vsel %vm191, 0.0, %v187
  %v196 = vsel %vm192, 0.0, %v188
  %v197 = vsel %vm193, 0.0, %v189
  %v198 = vsel %vm194, 0.0, %v190
  %v199 = vmul.f32 %v8, %v152
  %v200 = vmul.f32 %v9, %v153
  %v201 = vmul.f32 %v10, %v154
  %v202 = vmul.f32 %v11, %v155
  %v203 = vsel %vm144, %v199, %v29
  %v204 = vsel %vm145, %v200, %v30
  %v205 = vsel %vm146, %v201, %v31
  %v206 = vsel %vm147, %v202, %v32
  %v207 = vmul.f32 %v195, %v203
  %v208 = vmul.f32 %v196, %v204
  %v209 = vmul.f32 %v197, %v205
  %v210 = vmul.f32 %v198, %v206
  %211 = vst [vmem:[%s1] sm:$0xff] %v207
  %212 = vst [vmem:[%s1 + $0x8] sm:$0xff] %v208
  %213 = vst [vmem:[%s1 + $0x10] sm:$0xff] %v209
  %214 = vst [vmem:[%s1 + $0x18] sm:$0xff] %v210
  // Predicated region
  $region6: #{complex_batch_normalize.1} parent=0 // pred_check
    _
  $region7: #{complex_batch_normalize.1} parent=0 // pred_check_branch
    %216 = sbr.rel (0) target = $region9
  $region8: #{complex_batch_normalize.1} parent=0 // pred_region
    _
  $region9: #{complex_batch_normalize.1} parent=0 // pred_fallthru
    _
  // Predicated region
  $region10: #{complex_batch_normalize.1} parent=0 // pred_check
    _
  $region11: #{complex_batch_normalize.1} parent=0 // pred_check_branch
    %218 = sbr.rel (0) target = $region13
  $region12: #{complex_batch_normalize.1} parent=0 // pred_region
    _
  $region13: #{complex_batch_normalize.1} parent=0 // pred_fallthru
    _

</llo_original>
